<compile_context>
chip_gen: v7x
topology: tpu7x:2x2x1
jax: 0.10.0
libtpu: 0.0.40
codegen_flags: <defaults>
</compile_context>

<pallas_src>
import functools
import math

import jax
import jax.numpy as jnp
from jax import lax
from jax.experimental import pallas as pl
from jax.experimental.pallas import tpu as pltpu


def _i32(v):
    """Python int -> wrapped int32 constant (two's-complement)."""
    v &= 0xFFFFFFFF
    if v >= 1 << 31:
        v -= 1 << 32
    return jnp.int32(v)


_MIX_C1 = 0x7FEB352D
_MIX_C2 = 0x846CA68B
_GOLDEN = 0x9E3779B9


def _lsr(x, s):
    """Logical right shift for int32 values (arithmetic shift + mask)."""
    return (x >> s) & _i32((1 << (32 - s)) - 1)


def _mix32(x):
    """32-bit avalanche mixer (murmur/splitmix-style finalizer) on int32."""
    x = x ^ _lsr(x, 16)
    x = x * _i32(_MIX_C1)
    x = x ^ _lsr(x, 15)
    x = x * _i32(_MIX_C2)
    x = x ^ _lsr(x, 16)
    return x


def _bits_to_unit(bits):
    """Random int32 bits -> f32 uniform in [0, 1) via the exponent trick
    (mantissa OR 1.0's exponent, bitcast, subtract 1) -- no int->float convert."""
    mant = _lsr(bits, 9) | _i32(0x3F800000)
    return lax.bitcast_convert_type(mant, jnp.float32) - jnp.float32(1.0)


def _op_plus_noise_kernel(seed_ref, x_ref, w_ref, o_ref, acc_ref, *,
                          noise_sigma, n_cols, compute_dtype):
    # Hoist ALL grid-position reads out of the pl.when bodies (required for
    # the CPU interpret fallback; harmless / identical codegen on Mosaic).
    m = pl.program_id(0)
    n = pl.program_id(1)
    k = pl.program_id(2)
    k_last = pl.num_programs(2) - 1

    # ---- init accumulator on the first K step ------------------------------
    @pl.when(k == 0)
    def _():
        acc_ref[...] = jnp.zeros_like(acc_ref)

    # ---- internal operator: X_tile @ W_tile on the MXU (bf16 in, f32 acc) --
    acc_ref[...] += jnp.dot(
        x_ref[...].astype(compute_dtype),
        w_ref[...].astype(compute_dtype),
        preferred_element_type=jnp.float32,
    )

    # ---- finalize: add noise_sigma * N(0,1) and store -----------------------
    @pl.when(k == k_last)
    def _():
        tm, tn = o_ref.shape
        half = tn // 2

        key = _mix32(seed_ref[0] ^ _i32(_GOLDEN))

        # Globally-unique counter per Box-Muller pair (each pair feeds two
        # output lanes: the cos half and the sin half of this tile).
        row = lax.broadcasted_iota(jnp.int32, (tm, half), 0) + m * tm
        pcol = lax.broadcasted_iota(jnp.int32, (tm, half), 1) + n * half
        pair_id = row * (n_cols // 2) + pcol

        bits1 = _mix32(_mix32(pair_id * 2) ^ key)
        bits2 = _mix32(_mix32(pair_id * 2 + 1) ^ key)

        u1 = jnp.float32(1.0) - _bits_to_unit(bits1)   # (0, 1]: log-safe
        u2 = _bits_to_unit(bits2)                      # [0, 1)

        r = jnp.sqrt(jnp.float32(-2.0) * jnp.log(u1))
        theta = jnp.float32(2.0 * math.pi) * u2
        z = jnp.concatenate([r * jnp.cos(theta), r * jnp.sin(theta)], axis=-1)

        o_ref[...] = (acc_ref[...]
                      + jnp.float32(noise_sigma) * z).astype(o_ref.dtype)


def operator_plus_noise(x, w, noise_sigma, seed, *,
                        tm=None, tn=None, tk=None,
                        compute_dtype=jnp.bfloat16):
    """x: (B, C, H, W) float32; w: (H*W, H*W) float32; returns (B, C, H, W).

    Computes  X_flat @ W  (operator applied on the right)  + sigma * N(0, 1).
    """
    B, C, H, W = x.shape
    M = B * C
    HW = H * W
    assert w.shape == (HW, HW)
    assert M % 8 == 0 and HW % 128 == 0, "tile-alignment for (8,128) vregs"

    # Default tiles bounded for v7x's 64 MiB physical / 32 MiB scoped VMEM
    # (f32 tiles, x2 double-buffering per input) while staying lane-dense.
    tm = tm or min(M, 256)
    tn = tn or min(HW, 512)
    tk = tk or min(HW, 512)
    assert M % tm == 0 and HW % tn == 0 and HW % tk == 0
    assert tn % 2 == 0, "Box-Muller pairs the two lane halves of the N tile"

    x_flat = x.reshape(M, HW)
    seed_arr = jnp.asarray([seed], dtype=jnp.int32)

    grid = (M // tm, HW // tn, HW // tk)   # K last (reduction axis)

    kernel = functools.partial(
        _op_plus_noise_kernel,
        noise_sigma=float(noise_sigma),
        n_cols=HW,
        compute_dtype=compute_dtype,
    )

    out_flat = pl.pallas_call(
        kernel,
        out_shape=jax.ShapeDtypeStruct((M, HW), x.dtype),
        grid_spec=pltpu.PrefetchScalarGridSpec(
            num_scalar_prefetch=1,
            grid=grid,
            in_specs=[
                pl.BlockSpec((tm, tk), lambda m, n, k, seed: (m, k)),
                pl.BlockSpec((tk, tn), lambda m, n, k, seed: (k, n)),
            ],
            out_specs=pl.BlockSpec((tm, tn), lambda m, n, k, seed: (m, n)),
            scratch_shapes=[pltpu.VMEM((tm, tn), jnp.float32)],
        ),
        compiler_params=pltpu.CompilerParams(
            dimension_semantics=("parallel", "parallel", "arbitrary"),
        ),
    )(seed_arr, x_flat, w)

    return out_flat.reshape(B, C, H, W)


if __name__ == "__main__":
    # Small shapes consistent with the module's forward (NCHW input).
    B, C, H, W = 2, 4, 16, 16
    HW = H * W
    noise_sigma = 0.1

    key = jax.random.PRNGKey(0)
    kx, kw = jax.random.split(key)
    x = jax.random.normal(kx, (B, C, H, W), dtype=jnp.float32)
    # Deterministic synthetic linear operator (stands in for the seismic
    # forward operator passed to OperatorPlusNoise.__init__).
    w_op = jax.random.normal(kw, (HW, HW), dtype=jnp.float32) / jnp.sqrt(
        jnp.float32(HW)
    )

    # 128x128 N/K tiles -> grid (1, 2, 2): exercises multi-step accumulation
    # and the noise-on-finalize branch across several output tiles.
    out = operator_plus_noise(x, w_op, noise_sigma, seed=1234, tn=128, tk=128)
    jax.block_until_ready(out)

    # Sanity: output = A_x + O(sigma) Gaussian noise.
    a_x_ref = (x.reshape(B * C, HW) @ w_op).reshape(B, C, H, W)
    assert out.shape == a_x_ref.shape and out.dtype == a_x_ref.dtype
    resid = out - a_x_ref
    assert float(jnp.max(jnp.abs(resid))) < 10.0 * noise_sigma  # |z| <= ~5.6
    resid_std = float(jnp.std(resid))
    assert 0.5 * noise_sigma < resid_std < 2.0 * noise_sigma
    assert abs(float(jnp.mean(resid))) < 0.03

    print("KERNEL_OK")
</pallas_src>

<mosaic_0001>
module attributes {stable_mosaic.version = 11 : i64} {
  func.func @_op_plus_noise_kernel(%arg0: i32, %arg1: i32, %arg2: i32, %arg3: memref<1xi32, #tpu.memory_space<smem>>, %arg4: memref<8x128xf32, #tpu.memory_space<vmem>>, %arg5: memref<128x128xf32, #tpu.memory_space<vmem>>, %arg6: memref<8x128xf32, #tpu.memory_space<vmem>>, %arg7: memref<8x128xf32, #tpu.memory_space<vmem>>) attributes {dimension_semantics = [#tpu.dimension_semantics<parallel>, #tpu.dimension_semantics<parallel>, #tpu.dimension_semantics<arbitrary>], iteration_bounds = array<i64: 1, 2, 2>, scalar_prefetch = 1 : i64, scratch_operands = 1 : i64, tpu.core_type = #tpu.core_type<tc>, window_params = [{transform_indices = @transform_0, window_bounds = array<i64: 8, 128>}, {transform_indices = @transform_1, window_bounds = array<i64: 128, 128>}, {transform_indices = @transform_2, window_bounds = array<i64: 8, 128>}]} {
    %c0_i32 = arith.constant 0 : i32
    %0 = arith.cmpi eq, %arg2, %c0_i32 : i32
    %1 = arith.extui %0 : i1 to i32
    %c0_i32_0 = arith.constant 0 : i32
    %2 = arith.cmpi ne, %1, %c0_i32_0 : i32
    scf.if %2 {
      %cst_9 = arith.constant 0.000000e+00 : f32
      %14 = vector.broadcast %cst_9 : f32 to vector<8x128xf32>
      %c0_10 = arith.constant 0 : index
      %c0_11 = arith.constant 0 : index
      %15 = vector.load %arg7[%c0_10, %c0_11] : memref<8x128xf32, #tpu.memory_space<vmem>>, vector<8x128xf32>
      tpu.vector_store %arg7[%c0_10, %c0_11], %14 {strides = array<i32>} : memref<8x128xf32, #tpu.memory_space<vmem>>, vector<8x128xf32>,
    } else {
    }
    %c0 = arith.constant 0 : index
    %c0_1 = arith.constant 0 : index
    %3 = vector.load %arg7[%c0, %c0_1] : memref<8x128xf32, #tpu.memory_space<vmem>>, vector<8x128xf32>
    %c0_2 = arith.constant 0 : index
    %c0_3 = arith.constant 0 : index
    %4 = vector.load %arg4[%c0_2, %c0_3] : memref<8x128xf32, #tpu.memory_space<vmem>>, vector<8x128xf32>
    %5 = arith.truncf %4 : vector<8x128xf32> to vector<8x128xbf16>
    %c0_4 = arith.constant 0 : index
    %c0_5 = arith.constant 0 : index
    %6 = vector.load %arg5[%c0_4, %c0_5] : memref<128x128xf32, #tpu.memory_space<vmem>>, vector<128x128xf32>
    %7 = arith.truncf %6 : vector<128x128xf32> to vector<128x128xbf16>
    %cst = arith.constant dense<0.000000e+00> : vector<8x128xf32>
    %8 = tpu.matmul %5, %7, %cst {dimension_numbers = #tpu.dot_dimension_numbers<[1], [0], [0], [1], [0, 0, 1, 1], [], []>} : vector<8x128xbf16>, vector<128x128xbf16>, vector<8x128xf32> -> vector<8x128xf32>
    %9 = arith.addf %3, %8 : vector<8x128xf32>
    %c0_6 = arith.constant 0 : index
    %c0_7 = arith.constant 0 : index
    %10 = vector.load %arg7[%c0_6, %c0_7] : memref<8x128xf32, #tpu.memory_space<vmem>>, vector<8x128xf32>
    tpu.vector_store %arg7[%c0_6, %c0_7], %9 {strides = array<i32>} : memref<8x128xf32, #tpu.memory_space<vmem>>, vector<8x128xf32>,
    %c1_i32 = arith.constant 1 : i32
    %11 = arith.cmpi eq, %arg2, %c1_i32 : i32
    %12 = arith.extui %11 : i1 to i32
    %c0_i32_8 = arith.constant 0 : i32
    %13 = arith.cmpi ne, %12, %c0_i32_8 : i32
    scf.if %13 {
      %c0_9 = arith.constant 0 : index
      %14 = memref.load %arg3[%c0_9] : memref<1xi32, #tpu.memory_space<smem>>
      %c-1640531527_i32 = arith.constant -1640531527 : i32
      %15 = arith.xori %14, %c-1640531527_i32 : i32
      %c16_i32 = arith.constant 16 : i32
      %16 = arith.shrsi %15, %c16_i32 : i32
      %c65535_i32 = arith.constant 65535 : i32
      %17 = arith.andi %16, %c65535_i32 : i32
      %18 = arith.xori %15, %17 : i32
      %c2146121005_i32 = arith.constant 2146121005 : i32
      %19 = arith.muli %18, %c2146121005_i32 : i32
      %c15_i32 = arith.constant 15 : i32
      %20 = arith.shrsi %19, %c15_i32 : i32
      %c131071_i32 = arith.constant 131071 : i32
      %21 = arith.andi %20, %c131071_i32 : i32
      %22 = arith.xori %19, %21 : i32
      %c-2073254261_i32 = arith.constant -2073254261 : i32
      %23 = arith.muli %22, %c-2073254261_i32 : i32
      %c16_i32_10 = arith.constant 16 : i32
      %24 = arith.shrsi %23, %c16_i32_10 : i32
      %c65535_i32_11 = arith.constant 65535 : i32
      %25 = arith.andi %24, %c65535_i32_11 : i32
      %26 = arith.xori %23, %25 : i32
      %27 = tpu.iota {dimensions = array<i32: 0>} : vector<8x64xi32>
      %c8_i32 = arith.constant 8 : i32
      %28 = arith.muli %arg0, %c8_i32 : i32
      %29 = vector.broadcast %28 : i32 to vector<8x64xi32>
      %30 = arith.addi %27, %29 : vector<8x64xi32>
      %31 = tpu.iota {dimensions = array<i32: 1>} : vector<8x64xi32>
      %c64_i32 = arith.constant 64 : i32
      %32 = arith.muli %arg1, %c64_i32 : i32
      %33 = vector.broadcast %32 : i32 to vector<8x64xi32>
      %34 = arith.addi %31, %33 : vector<8x64xi32>
      %c128_i32 = arith.constant 128 : i32
      %35 = vector.broadcast %c128_i32 : i32 to vector<8x64xi32>
      %36 = arith.muli %30, %35 : vector<8x64xi32>
      %37 = arith.addi %36, %34 : vector<8x64xi32>
      %c2_i32 = arith.constant 2 : i32
      %38 = vector.broadcast %c2_i32 : i32 to vector<8x64xi32>
      %39 = arith.muli %37, %38 : vector<8x64xi32>
      %c16_i32_12 = arith.constant 16 : i32
      %40 = vector.broadcast %c16_i32_12 : i32 to vector<8x64xi32>
      %41 = arith.shrsi %39, %40 : vector<8x64xi32>
      %c65535_i32_13 = arith.constant 65535 : i32
      %42 = vector.broadcast %c65535_i32_13 : i32 to vector<8x64xi32>
      %43 = arith.andi %41, %42 : vector<8x64xi32>
      %44 = arith.xori %39, %43 : vector<8x64xi32>
      %c2146121005_i32_14 = arith.constant 2146121005 : i32
      %45 = vector.broadcast %c2146121005_i32_14 : i32 to vector<8x64xi32>
      %46 = arith.muli %44, %45 : vector<8x64xi32>
      %c15_i32_15 = arith.constant 15 : i32
      %47 = vector.broadcast %c15_i32_15 : i32 to vector<8x64xi32>
      %48 = arith.shrsi %46, %47 : vector<8x64xi32>
      %c131071_i32_16 = arith.constant 131071 : i32
      %49 = vector.broadcast %c131071_i32_16 : i32 to vector<8x64xi32>
      %50 = arith.andi %48, %49 : vector<8x64xi32>
      %51 = arith.xori %46, %50 : vector<8x64xi32>
      %c-2073254261_i32_17 = arith.constant -2073254261 : i32
      %52 = vector.broadcast %c-2073254261_i32_17 : i32 to vector<8x64xi32>
      %53 = arith.muli %51, %52 : vector<8x64xi32>
      %c16_i32_18 = arith.constant 16 : i32
      %54 = vector.broadcast %c16_i32_18 : i32 to vector<8x64xi32>
      %55 = arith.shrsi %53, %54 : vector<8x64xi32>
      %c65535_i32_19 = arith.constant 65535 : i32
      %56 = vector.broadcast %c65535_i32_19 : i32 to vector<8x64xi32>
      %57 = arith.andi %55, %56 : vector<8x64xi32>
      %58 = arith.xori %53, %57 : vector<8x64xi32>
      %59 = vector.broadcast %26 : i32 to vector<8x64xi32>
      %60 = arith.xori %58, %59 : vector<8x64xi32>
      %c16_i32_20 = arith.constant 16 : i32
      %61 = vector.broadcast %c16_i32_20 : i32 to vector<8x64xi32>
      %62 = arith.shrsi %60, %61 : vector<8x64xi32>
      %c65535_i32_21 = arith.constant 65535 : i32
      %63 = vector.broadcast %c65535_i32_21 : i32 to vector<8x64xi32>
      %64 = arith.andi %62, %63 : vector<8x64xi32>
      %65 = arith.xori %60, %64 : vector<8x64xi32>
      %c2146121005_i32_22 = arith.constant 2146121005 : i32
      %66 = vector.broadcast %c2146121005_i32_22 : i32 to vector<8x64xi32>
      %67 = arith.muli %65, %66 : vector<8x64xi32>
      %c15_i32_23 = arith.constant 15 : i32
      %68 = vector.broadcast %c15_i32_23 : i32 to vector<8x64xi32>
      %69 = arith.shrsi %67, %68 : vector<8x64xi32>
      %c131071_i32_24 = arith.constant 131071 : i32
      %70 = vector.broadcast %c131071_i32_24 : i32 to vector<8x64xi32>
      %71 = arith.andi %69, %70 : vector<8x64xi32>
      %72 = arith.xori %67, %71 : vector<8x64xi32>
      %c-2073254261_i32_25 = arith.constant -2073254261 : i32
      %73 = vector.broadcast %c-2073254261_i32_25 : i32 to vector<8x64xi32>
      %74 = arith.muli %72, %73 : vector<8x64xi32>
      %c16_i32_26 = arith.constant 16 : i32
      %75 = vector.broadcast %c16_i32_26 : i32 to vector<8x64xi32>
      %76 = arith.shrsi %74, %75 : vector<8x64xi32>
      %c65535_i32_27 = arith.constant 65535 : i32
      %77 = vector.broadcast %c65535_i32_27 : i32 to vector<8x64xi32>
      %78 = arith.andi %76, %77 : vector<8x64xi32>
      %79 = arith.xori %74, %78 : vector<8x64xi32>
      %c2_i32_28 = arith.constant 2 : i32
      %80 = vector.broadcast %c2_i32_28 : i32 to vector<8x64xi32>
      %81 = arith.muli %37, %80 : vector<8x64xi32>
      %c1_i32_29 = arith.constant 1 : i32
      %82 = vector.broadcast %c1_i32_29 : i32 to vector<8x64xi32>
      %83 = arith.addi %81, %82 : vector<8x64xi32>
      %c16_i32_30 = arith.constant 16 : i32
      %84 = vector.broadcast %c16_i32_30 : i32 to vector<8x64xi32>
      %85 = arith.shrsi %83, %84 : vector<8x64xi32>
      %c65535_i32_31 = arith.constant 65535 : i32
      %86 = vector.broadcast %c65535_i32_31 : i32 to vector<8x64xi32>
      %87 = arith.andi %85, %86 : vector<8x64xi32>
      %88 = arith.xori %83, %87 : vector<8x64xi32>
      %c2146121005_i32_32 = arith.constant 2146121005 : i32
      %89 = vector.broadcast %c2146121005_i32_32 : i32 to vector<8x64xi32>
      %90 = arith.muli %88, %89 : vector<8x64xi32>
      %c15_i32_33 = arith.constant 15 : i32
      %91 = vector.broadcast %c15_i32_33 : i32 to vector<8x64xi32>
      %92 = arith.shrsi %90, %91 : vector<8x64xi32>
      %c131071_i32_34 = arith.constant 131071 : i32
      %93 = vector.broadcast %c131071_i32_34 : i32 to vector<8x64xi32>
      %94 = arith.andi %92, %93 : vector<8x64xi32>
      %95 = arith.xori %90, %94 : vector<8x64xi32>
      %c-2073254261_i32_35 = arith.constant -2073254261 : i32
      %96 = vector.broadcast %c-2073254261_i32_35 : i32 to vector<8x64xi32>
      %97 = arith.muli %95, %96 : vector<8x64xi32>
      %c16_i32_36 = arith.constant 16 : i32
      %98 = vector.broadcast %c16_i32_36 : i32 to vector<8x64xi32>
      %99 = arith.shrsi %97, %98 : vector<8x64xi32>
      %c65535_i32_37 = arith.constant 65535 : i32
      %100 = vector.broadcast %c65535_i32_37 : i32 to vector<8x64xi32>
      %101 = arith.andi %99, %100 : vector<8x64xi32>
      %102 = arith.xori %97, %101 : vector<8x64xi32>
      %103 = vector.broadcast %26 : i32 to vector<8x64xi32>
      %104 = arith.xori %102, %103 : vector<8x64xi32>
      %c16_i32_38 = arith.constant 16 : i32
      %105 = vector.broadcast %c16_i32_38 : i32 to vector<8x64xi32>
      %106 = arith.shrsi %104, %105 : vector<8x64xi32>
      %c65535_i32_39 = arith.constant 65535 : i32
      %107 = vector.broadcast %c65535_i32_39 : i32 to vector<8x64xi32>
      %108 = arith.andi %106, %107 : vector<8x64xi32>
      %109 = arith.xori %104, %108 : vector<8x64xi32>
      %c2146121005_i32_40 = arith.constant 2146121005 : i32
      %110 = vector.broadcast %c2146121005_i32_40 : i32 to vector<8x64xi32>
      %111 = arith.muli %109, %110 : vector<8x64xi32>
      %c15_i32_41 = arith.constant 15 : i32
      %112 = vector.broadcast %c15_i32_41 : i32 to vector<8x64xi32>
      %113 = arith.shrsi %111, %112 : vector<8x64xi32>
      %c131071_i32_42 = arith.constant 131071 : i32
      %114 = vector.broadcast %c131071_i32_42 : i32 to vector<8x64xi32>
      %115 = arith.andi %113, %114 : vector<8x64xi32>
      %116 = arith.xori %111, %115 : vector<8x64xi32>
      %c-2073254261_i32_43 = arith.constant -2073254261 : i32
      %117 = vector.broadcast %c-2073254261_i32_43 : i32 to vector<8x64xi32>
      %118 = arith.muli %116, %117 : vector<8x64xi32>
      %c16_i32_44 = arith.constant 16 : i32
      %119 = vector.broadcast %c16_i32_44 : i32 to vector<8x64xi32>
      %120 = arith.shrsi %118, %119 : vector<8x64xi32>
      %c65535_i32_45 = arith.constant 65535 : i32
      %121 = vector.broadcast %c65535_i32_45 : i32 to vector<8x64xi32>
      %122 = arith.andi %120, %121 : vector<8x64xi32>
      %123 = arith.xori %118, %122 : vector<8x64xi32>
      %c9_i32 = arith.constant 9 : i32
      %124 = vector.broadcast %c9_i32 : i32 to vector<8x64xi32>
      %125 = arith.shrsi %79, %124 : vector<8x64xi32>
      %c8388607_i32 = arith.constant 8388607 : i32
      %126 = vector.broadcast %c8388607_i32 : i32 to vector<8x64xi32>
      %127 = arith.andi %125, %126 : vector<8x64xi32>
      %c1065353216_i32 = arith.constant 1065353216 : i32
      %128 = vector.broadcast %c1065353216_i32 : i32 to vector<8x64xi32>
      %129 = arith.ori %127, %128 : vector<8x64xi32>
      %130 = tpu.bitcast %129 : vector<8x64xi32> -> vector<8x64xf32>
      %cst_46 = arith.constant 1.000000e+00 : f32
      %131 = vector.broadcast %cst_46 : f32 to vector<8x64xf32>
      %132 = arith.subf %130, %131 : vector<8x64xf32>
      %cst_47 = arith.constant 1.000000e+00 : f32
      %133 = vector.broadcast %cst_47 : f32 to vector<8x64xf32>
      %134 = arith.subf %133, %132 : vector<8x64xf32>
      %c9_i32_48 = arith.constant 9 : i32
      %135 = vector.broadcast %c9_i32_48 : i32 to vector<8x64xi32>
      %136 = arith.shrsi %123, %135 : vector<8x64xi32>
      %c8388607_i32_49 = arith.constant 8388607 : i32
      %137 = vector.broadcast %c8388607_i32_49 : i32 to vector<8x64xi32>
      %138 = arith.andi %136, %137 : vector<8x64xi32>
      %c1065353216_i32_50 = arith.constant 1065353216 : i32
      %139 = vector.broadcast %c1065353216_i32_50 : i32 to vector<8x64xi32>
      %140 = arith.ori %138, %139 : vector<8x64xi32>
      %141 = tpu.bitcast %140 : vector<8x64xi32> -> vector<8x64xf32>
      %cst_51 = arith.constant 1.000000e+00 : f32
      %142 = vector.broadcast %cst_51 : f32 to vector<8x64xf32>
      %143 = arith.subf %141, %142 : vector<8x64xf32>
      %144 = math.log %134 : vector<8x64xf32>
      %cst_52 = arith.constant -2.000000e+00 : f32
      %145 = vector.broadcast %cst_52 : f32 to vector<8x64xf32>
      %146 = arith.mulf %145, %144 : vector<8x64xf32>
      %147 = math.sqrt %146 : vector<8x64xf32>
      %cst_53 = arith.constant 6.28318548 : f32
      %148 = vector.broadcast %cst_53 : f32 to vector<8x64xf32>
      %149 = arith.mulf %148, %143 : vector<8x64xf32>
      %150 = math.cos %149 : vector<8x64xf32>
      %151 = arith.mulf %147, %150 : vector<8x64xf32>
      %152 = math.sin %149 : vector<8x64xf32>
      %153 = arith.mulf %147, %152 : vector<8x64xf32>
      %154 = tpu.concatenate %151, %153 in 1 : vector<8x64xf32>, vector<8x64xf32> -> vector<8x128xf32>
      %c0_54 = arith.constant 0 : index
      %c0_55 = arith.constant 0 : index
      %155 = vector.load %arg7[%c0_54, %c0_55] : memref<8x128xf32, #tpu.memory_space<vmem>>, vector<8x128xf32>
      %cst_56 = arith.constant 1.000000e-01 : f32
      %156 = vector.broadcast %cst_56 : f32 to vector<8x128xf32>
      %157 = arith.mulf %156, %154 : vector<8x128xf32>
      %158 = arith.addf %155, %157 : vector<8x128xf32>
      %c0_57 = arith.constant 0 : index
      %c0_58 = arith.constant 0 : index
      %159 = vector.load %arg6[%c0_57, %c0_58] : memref<8x128xf32, #tpu.memory_space<vmem>>, vector<8x128xf32>
      tpu.vector_store %arg6[%c0_57, %c0_58], %158 {strides = array<i32>} : memref<8x128xf32, #tpu.memory_space<vmem>>, vector<8x128xf32>,
    } else {
    }
    return
  }
  func.func @transform_0(%arg0: i32, %arg1: i32, %arg2: i32, %arg3: memref<1xi32, #tpu.memory_space<smem>>) -> (i32, i32) {
    %c0_i32 = arith.constant 0 : i32
    return %arg0, %arg2 : i32, i32
  }
  func.func @transform_1(%arg0: i32, %arg1: i32, %arg2: i32, %arg3: memref<1xi32, #tpu.memory_space<smem>>) -> (i32, i32) {
    %c0_i32 = arith.constant 0 : i32
    return %arg2, %arg1 : i32, i32
  }
  func.func @transform_2(%arg0: i32, %arg1: i32, %arg2: i32, %arg3: memref<1xi32, #tpu.memory_space<smem>>) -> (i32, i32) {
    %c0_i32 = arith.constant 0 : i32
    return %arg0, %arg1 : i32, i32
  }
}

</mosaic_0001>

<llo_original>
// kernel: tpu_custom_call.1
$region0: #{tpu_custom_call.1}
  #allocation0 [shape = 'u32[]', space=smem, size = 0x4, offset = 0x4, fixed_abs, tag = 'smem constant byte address 0x4 - core index']
  #allocation1 [shape = 'u32[144,128]{1,0:T(1,128)}', space=vmem, size = 0x12000, scoped, tag = 'internal scratch']
  #allocation2 [shape = 'f32[8,128]{1,0:T(8,128)}', space=vmem, size = 0x1000, scoped, tag = 'scratch operand']
  #allocation3 [shape = 's32[1]{0}', space=sflag, size = 0x4, scoped, tag = 'scoped memory for tpu_custom_call.1']
  #allocation4 [shape = 's32[1]{0:T(128)S(6)}', space=smem, size = 0x200, scoped, tag = 'prefetched SMEM operand 0']
  %s0 = inlined_call_operand.<no memory space> [shape: s32[1], index: 0, kind: input, shape index: {}]
  %s1 = inlined_call_operand.hbm [shape: f32[8,256], index: 1, kind: input, shape index: {}]
  %s2 = inlined_call_operand.hbm [shape: f32[256,256], index: 2, kind: input, shape index: {}]
  %s3 = inlined_call_operand.hbm [shape: f32[8,256], index: 3, kind: output, shape index: {}]
  %s4 = sld [smem:[#allocation0]]
  $region57: #{tpu_custom_call.1} parent=0
    _
  %s6 = ssub.s32 1, %s4
  %s7 = scalar_select 0, %s6, %s4
  %8 = sst [smem:[#allocation4]] %s0
  $region1: #{tpu_custom_call.1} parent=0
    #allocation5 [shape = 'u8[8192]{0}', space=vmem, size = 0x2000, scoped, tag = 'input window, operand 1']
    #allocation6 [shape = 's32[2]{0}', space=sflag, size = 0x8, scoped, tag = 'scoped memory for tpu_custom_call.1']
    #allocation7 [shape = 's32[2]{0}', space=sflag, size = 0x8, scoped, tag = 'scoped memory for tpu_custom_call.1']
    #allocation8 [shape = 'u8[131072]{0}', space=vmem, size = 0x20000, scoped, tag = 'input window, operand 2']
    #allocation9 [shape = 's32[2]{0}', space=sflag, size = 0x8, scoped, tag = 'scoped memory for tpu_custom_call.1']
    #allocation10 [shape = 'u8[8192]{0}', space=vmem, size = 0x2000, scoped, tag = 'output window, operand 0']
    %9 = vsyncpa [#allocation6], 0
    %s10 = scalar_lea.sflag [#allocation6], 1
    %11 = vsyncpa %s10, 0
    %12 = vsyncpa [#allocation9], 0
    %s13 = scalar_lea.sflag [#allocation9], 1
    %14 = vsyncpa %s13, 0
    %15 = vsyncpa [#allocation7], 0
    %s16 = scalar_lea.sflag [#allocation7], 1
    %17 = vsyncpa %s16, 0
    loop: start=0, step=1, limit=6
    $region2: #{tpu_custom_call.1} parent=1 // loop_pre_header
      _
    $region3: #{tpu_custom_call.1} parent=1 // loop_header
      %s19 = sphi 0, %s23
      %p20 = scmp.ge.s32.totalorder %s19, 6
      %s26 = sphi 0, %s45
      %s27 = sphi 0, %s41
      %s28 = sphi 0, %s37
      %s29 = sphi 0, %s26
      %s30 = sphi 0, %s27
      %s31 = sphi 0, %s28
      %s32 = sphi 0, %s29
      %s33 = sphi 0, %s30
      %s34 = sphi 0, %s31
      %s50 = sphi 0, %s52
      %s53 = sphi 0, %s50
      %s54 = sphi 0, %s53
      %s70 = sphi 0, %s54
      %s78 = sphi 0, %s80
      %s81 = sphi 0, %s78
      %s82 = sphi 0, %s81
      %s98 = sphi 0, %s82
      %s106 = sphi 0, %s108
      %s109 = sphi 0, %s106
      %s110 = sphi 0, %s109
      %s126 = sphi 0, %s110
    $region4: #{tpu_custom_call.1} parent=1 // loop_header_branch
      %22 = sbr.rel (%p20) target = $region8
    $region5: #{tpu_custom_call.1} parent=1 // loop_body
      %s24 = ssub.s32 %s19, 1
      %s25 = ssub.s32 %s19, 2
      %s35 = sadd.s32 1, %s28
      %p36 = scmp.ge.s32.totalorder %s35, 2
      %s37 = scalar_select %p36, 0, %s35
      %s38 = sadd.s32 1, %s27
      %s39 = scalar_select %p36, %s38, %s27
      %p40 = scmp.ge.s32.totalorder %s39, 2
      %s41 = scalar_select %p40, 0, %s39
      %s42 = sadd.s32 1, %s26
      %s43 = scalar_select %p40, %s42, %s26
      %p44 = scmp.ge.s32.totalorder %s43, 1
      %s45 = scalar_select %p44, 0, %s43
      %s46 = ssub.s32 %s26, %s45
      %s47 = ssub.s32 %s28, %s37
      %s48 = sor.u32 %s46, %s47
      %p49 = scmp.eq.s32.totalorder %s48, 0
      %s51 = sadd.s32 %s50, 1
      %s52 = scalar_select %p49, %s50, %s51
      %p55 = pneg %p49
      %p56 = scmp.eq.s32.totalorder %s19, 3
      %p57 = por %p55, %p56
      %p58 = scmp.ne.s32.totalorder %s50, %s53
      %p59 = scmp.eq.s32.totalorder %s19, 0
      %p60 = por %p58, %p59
      %p61 = scmp.ne.s32.totalorder %s50, %s53
      %p62 = scmp.eq.s32.totalorder %s24, 3
      %p63 = por %p61, %p62
      %p64 = scmp.ne.s32.totalorder %s53, %s54
      %p65 = scmp.eq.s32.totalorder %s24, 0
      %p66 = por %p64, %p65
      %p67 = scmp.ne.s32.totalorder %s53, %s54
      %p68 = scmp.eq.s32.totalorder %s25, 3
      %p69 = por %p67, %p68
      %p71 = scmp.ne.s32.totalorder %s54, %s70
      %p72 = scmp.eq.s32.totalorder %s25, 0
      %p73 = por %p71, %p72
      %s74 = ssub.s32 %s28, %s37
      %s75 = ssub.s32 %s27, %s41
      %s76 = sor.u32 %s74, %s75
      %p77 = scmp.eq.s32.totalorder %s76, 0
      %s79 = sadd.s32 %s78, 1
      %s80 = scalar_select %p77, %s78, %s79
      %p83 = pneg %p77
      %p84 = scmp.eq.s32.totalorder %s19, 3
      %p85 = por %p83, %p84
      %p86 = scmp.ne.s32.totalorder %s78, %s81
      %p87 = scmp.eq.s32.totalorder %s19, 0
      %p88 = por %p86, %p87
      %p89 = scmp.ne.s32.totalorder %s78, %s81
      %p90 = scmp.eq.s32.totalorder %s24, 3
      %p91 = por %p89, %p90
      %p92 = scmp.ne.s32.totalorder %s81, %s82
      %p93 = scmp.eq.s32.totalorder %s24, 0
      %p94 = por %p92, %p93
      %p95 = scmp.ne.s32.totalorder %s81, %s82
      %p96 = scmp.eq.s32.totalorder %s25, 3
      %p97 = por %p95, %p96
      %p99 = scmp.ne.s32.totalorder %s82, %s98
      %p100 = scmp.eq.s32.totalorder %s25, 0
      %p101 = por %p99, %p100
      %s102 = ssub.s32 %s26, %s45
      %s103 = ssub.s32 %s27, %s41
      %s104 = sor.u32 %s102, %s103
      %p105 = scmp.eq.s32.totalorder %s104, 0
      %s107 = sadd.s32 %s106, 1
      %s108 = scalar_select %p105, %s106, %s107
      %p111 = pneg %p105
      %p112 = scmp.eq.s32.totalorder %s19, 3
      %p113 = por %p111, %p112
      %p114 = scmp.ne.s32.totalorder %s106, %s109
      %p115 = scmp.eq.s32.totalorder %s19, 0
      %p116 = por %p114, %p115
      %p117 = scmp.ne.s32.totalorder %s106, %s109
      %p118 = scmp.eq.s32.totalorder %s24, 3
      %p119 = por %p117, %p118
      %p120 = scmp.ne.s32.totalorder %s109, %s110
      %p121 = scmp.eq.s32.totalorder %s24, 0
      %p122 = por %p120, %p121
      %p123 = scmp.ne.s32.totalorder %s109, %s110
      %p124 = scmp.eq.s32.totalorder %s25, 3
      %p125 = por %p123, %p124
      %p127 = scmp.ne.s32.totalorder %s110, %s126
      %p128 = scmp.eq.s32.totalorder %s25, 0
      %p129 = por %p127, %p128
      %p130 = scmp.le.s32.totalorder 1, %s19
      %p131 = scmp.lt.s32.totalorder %s19, 5
      %p132 = pnand %p130, %p131
      %p133 = pneg %p132
      // Predicated region
      $region9: #{tpu_custom_call.1} parent=5 // pred_check
        _
      $region10: #{tpu_custom_call.1} parent=5 // pred_check_branch
        %135 = sbr.rel (%p132) target = $region12
      $region11: #{tpu_custom_call.1} parent=5 // pred_region
        %s136 = ssub.s32 %s19, 1
      $region12: #{tpu_custom_call.1} parent=5 // pred_fallthru
        _
      %p137 = scmp.lt.s32.totalorder %s19, 4
      // Predicated region
      $region13: #{tpu_custom_call.1} parent=5 // pred_check
        %p138 = pneg %p137
      $region14: #{tpu_custom_call.1} parent=5 // pred_check_branch
        %140 = sbr.rel (%p138) target = $region16
      $region15: #{tpu_custom_call.1} parent=5 // pred_region
        // Predicated region
        $region17: #{tpu_custom_call.1} parent=15 // pred_check
          %p141 = pneg %p60
        $region18: #{tpu_custom_call.1} parent=15 // pred_check_branch
          %143 = sbr.rel (%p141) target = $region20
        $region19: #{tpu_custom_call.1} parent=15 // pred_region
          %s144 = sand.u32 %s50, 1
          %s145 = scalar_lea.sflag [#allocation6], %s144
          %s146 = sand.u32 %s50, 1
          %s147 = smul.addr %s146, 8
          %s148 = scalar_lea.vmem [#allocation5], %s147
          %s150 = ssub.s32 128, 128
          %151 = vsyncadd %s145, %s150
          %s152 = smul.addr %s26, 2
          %s153 = sadd.s32 %s28, %s152
          %s154 = smul.addr %s153, 128
          %s155 = scalar_lea.hbm %s1, %s154
          %s157 = sshll.u32 %s148, 4
          %s158 = int_to_ptr.vmem [resolvable:$true] %s157
          %160 = dma.hbm_to_vmem [thread:$0]  %s155, 128, %s158, %s145
        $region20: #{tpu_custom_call.1} parent=15 // pred_fallthru
          _
        // Predicated region
        $region21: #{tpu_custom_call.1} parent=15 // pred_check
          %p161 = pneg %p88
        $region22: #{tpu_custom_call.1} parent=15 // pred_check_branch
          %163 = sbr.rel (%p161) target = $region24
        $region23: #{tpu_custom_call.1} parent=15 // pred_region
          %s164 = sand.u32 %s78, 1
          %s165 = scalar_lea.sflag [#allocation9], %s164
          %s166 = sand.u32 %s78, 1
          %s167 = smul.addr %s166, 128
          %s168 = scalar_lea.vmem [#allocation8], %s167
          %s169 = smul.u32 16, %s28
          %s171 = ssub.s32 2048, 2048
          %172 = vsyncadd %s165, %s171
          %s173 = smul.addr %s169, 2
          %s174 = sadd.s32 %s27, %s173
          %s175 = smul.addr %s174, 128
          %s176 = scalar_lea.hbm %s2, %s175
          %s177 = sshll.u32 %s168, 4
          %s178 = int_to_ptr.vmem [resolvable:$true] %s177
          %183 = dma.hbm_to_vmem [thread:$0]  %s176, 2048, %s178, %s165, 256, 128, 8
        $region24: #{tpu_custom_call.1} parent=15 // pred_fallthru
          _
      $region16: #{tpu_custom_call.1} parent=5 // pred_fallthru
        _
      %p184 = scmp.le.s32.totalorder 1, %s19
      %p185 = scmp.lt.s32.totalorder %s19, 5
      %p186 = pnand %p184, %p185
      %p187 = pneg %p186
      // Predicated region
      $region25: #{tpu_custom_call.1} parent=5 // pred_check
        _
      $region26: #{tpu_custom_call.1} parent=5 // pred_check_branch
        %189 = sbr.rel (%p186) target = $region28
      $region27: #{tpu_custom_call.1} parent=5 // pred_region
        %s190 = ssub.s32 %s19, 1
        %s191 = sand.u32 %s53, 1
        %s192 = scalar_lea.sflag [#allocation6], %s191
        %s193 = sand.u32 %s53, 1
        %s194 = smul.addr %s193, 8
        %s195 = scalar_lea.vmem [#allocation5], %s194
        // Predicated region
        $region29: #{tpu_custom_call.1} parent=27 // pred_check
          %p196 = pneg %p66
        $region30: #{tpu_custom_call.1} parent=27 // pred_check_branch
          %198 = sbr.rel (%p196) target = $region32
        $region31: #{tpu_custom_call.1} parent=27 // pred_region
          %199 = dma.done %s192, 128
        $region32: #{tpu_custom_call.1} parent=27 // pred_fallthru
          _
        %s200 = sand.u32 %s81, 1
        %s201 = scalar_lea.sflag [#allocation9], %s200
        %s202 = sand.u32 %s81, 1
        %s203 = smul.addr %s202, 128
        %s204 = scalar_lea.vmem [#allocation8], %s203
        // Predicated region
        $region33: #{tpu_custom_call.1} parent=27 // pred_check
          %p205 = pneg %p94
        $region34: #{tpu_custom_call.1} parent=27 // pred_check_branch
          %207 = sbr.rel (%p205) target = $region36
        $region35: #{tpu_custom_call.1} parent=27 // pred_region
          %208 = dma.done %s201, 2048
        $region36: #{tpu_custom_call.1} parent=27 // pred_fallthru
          _
        %s209 = sand.u32 %s53, 1
        %s210 = scalar_lea.sflag [#allocation6], %s209
        %s211 = sand.u32 %s53, 1
        %s212 = smul.addr %s211, 8
        %s213 = scalar_lea.vmem [#allocation5], %s212
        %p214 = pneg %p66
        %p215 = pneg %p63
        %s216 = sand.u32 %s81, 1
        %s217 = scalar_lea.sflag [#allocation9], %s216
        %s218 = sand.u32 %s81, 1
        %s219 = smul.addr %s218, 128
        %s220 = scalar_lea.vmem [#allocation8], %s219
        %p221 = pneg %p94
        %p222 = pneg %p91
        %p223 = pneg %p122
        %p224 = pneg %p119
        %s225 = sand.u32 %s109, 1
        %s226 = scalar_lea.sflag [#allocation7], %s225
        %s227 = sand.u32 %s109, 1
        %s228 = smul.addr %s227, 8
        %s229 = scalar_lea.vmem [#allocation10], %s228
        %s230 = smul.u32 16, %s31
        %p232 = scmp.eq.s32.totalorder %s31, 0
        // Predicated region
        $region37: #{tpu_custom_call.1} parent=27 // pred_check
          %p233 = pneg %p232
        $region38: #{tpu_custom_call.1} parent=27 // pred_check_branch
          %235 = sbr.rel (%p233) target = $region40
        $region39: #{tpu_custom_call.1} parent=27 // pred_region
          %236 = vst [vmem:[#allocation2] sm:$0xff] 0.0
        $region40: #{tpu_custom_call.1} parent=27 // pred_fallthru
          _
        %v237 = vld [vmem:[#allocation2] sm:$0xff]
        %v238 = vld [vmem:[%s195] sm:$0xff]
        %v239 = vpack.c.bf16 %v238, %v238
        %v240 = vld [vmem:[%s204] sm:$0xff]
        %v241 = vld [vmem:[%s204 + $0x8] sm:$0xff]
        %v242 = vld [vmem:[%s204 + $0x10] sm:$0xff]
        %v243 = vld [vmem:[%s204 + $0x18] sm:$0xff]
        %v244 = vld [vmem:[%s204 + $0x20] sm:$0xff]
        %v245 = vld [vmem:[%s204 + $0x28] sm:$0xff]
        %v246 = vld [vmem:[%s204 + $0x30] sm:$0xff]
        %v247 = vld [vmem:[%s204 + $0x38] sm:$0xff]
        %v248 = vld [vmem:[%s204 + $0x40] sm:$0xff]
        %v249 = vld [vmem:[%s204 + $0x48] sm:$0xff]
        %v250 = vld [vmem:[%s204 + $0x50] sm:$0xff]
        %v251 = vld [vmem:[%s204 + $0x58] sm:$0xff]
        %v252 = vld [vmem:[%s204 + $0x60] sm:$0xff]
        %v253 = vld [vmem:[%s204 + $0x68] sm:$0xff]
        %v254 = vld [vmem:[%s204 + $0x70] sm:$0xff]
        %v255 = vld [vmem:[%s204 + $0x78] sm:$0xff]
        %v256 = vpack.c.bf16 %v241, %v240
        %v257 = vpack.c.bf16 %v243, %v242
        %v258 = vpack.c.bf16 %v245, %v244
        %v259 = vpack.c.bf16 %v247, %v246
        %v260 = vpack.c.bf16 %v249, %v248
        %v261 = vpack.c.bf16 %v251, %v250
        %v262 = vpack.c.bf16 %v253, %v252
        %v263 = vpack.c.bf16 %v255, %v254
        %264 = vmatprep.subr.bf16.mxu0 0
        %265 = vmatpush1.bf16.msra.mxu0 %v256
        %266 = vmatprep.subr.bf16.mxu0 0
        %267 = vmatpush1.bf16.msra.mxu0 %v257
        %268 = vmatprep.subr.bf16.mxu0 0
        %269 = vmatpush1.bf16.msra.mxu0 %v258
        %270 = vmatprep.subr.bf16.mxu0 0
        %271 = vmatpush1.bf16.msra.mxu0 %v259
        %272 = vmatprep.subr.bf16.mxu0 0
        %273 = vmatpush1.bf16.msra.mxu0 %v260
        %274 = vmatprep.subr.bf16.mxu0 0
        %275 = vmatpush1.bf16.msra.mxu0 %v261
        %276 = vmatprep.subr.bf16.mxu0 0
        %277 = vmatpush1.bf16.msra.mxu0 %v262
        %278 = vmatprep.subr.bf16.mxu0 0
        %279 = vmatpush1.bf16.msra.mxu0 %v263
        %280 = vmatprep.subr.bf16.mxu0 0
        %281 = vmatpush1.bf16.msra.mxu0 0
        %282 = vmatprep.subr.bf16.mxu0 0
        %283 = vmatpush1.bf16.msra.mxu0 0
        %284 = vmatprep.subr.bf16.mxu0 0
        %285 = vmatpush1.bf16.msra.mxu0 0
        %286 = vmatprep.subr.bf16.mxu0 0
        %287 = vmatpush1.bf16.msra.mxu0 0
        %288 = vmatprep.subr.bf16.mxu0 0
        %289 = vmatpush1.bf16.msra.mxu0 0
        %290 = vmatprep.subr.bf16.mxu0 0
        %291 = vmatpush1.bf16.msra.mxu0 0
        %292 = vmatprep.subr.bf16.mxu0 0
        %293 = vmatpush1.bf16.msra.mxu0 0
        %294 = vmatprep.subr.bf16.mxu0 0
        %295 = vmatpush1.bf16.msra.mxu0 0
        %296 = vmatprep.mubr.bf16.mxu0 0
        %297 = vmatmul.mubr.bf16.gmra.mrb[0].mxu0 %v239
        %v298 = vpop.f32.mrb[0].mxu0
        %v299 = vadd.f32 0.0, %v298
        %v300 = vpop.f32.mrb[0].mxu0
        %v301 = vpop.f32.mrb[0].mxu0
        %v302 = vpop.f32.mrb[0].mxu0
        %303 = vdwg.mxu0
        %v304 = vadd.f32 %v237, %v299
        %305 = vst [vmem:[#allocation2] sm:$0xff] %v304
        %p306 = scmp.eq.s32.totalorder %s31, 1
        // Predicated region
        $region41: #{tpu_custom_call.1} parent=27 // pred_check
          %p307 = pneg %p306
        $region42: #{tpu_custom_call.1} parent=27 // pred_check_branch
          %309 = sbr.rel (%p307) target = $region44
        $region43: #{tpu_custom_call.1} parent=27 // pred_region
          %s310 = sld [smem:[#allocation4]]
          %s311 = sxor.u32 %s310, 2654435769
          %s312 = sshra.s32 %s311, 16
          %s313 = sand.u32 %s312, 65535
          %s314 = sxor.u32 %s311, %s313
          %s315 = smul.u32 %s314, 2146121005
          %s316 = sshra.s32 %s315, 15
          %s317 = sand.u32 %s316, 131071
          %s318 = sxor.u32 %s315, %s317
          %s319 = smul.u32 %s318, 2221713035
          %s320 = sshra.s32 %s319, 16
          %s321 = sand.u32 %s320, 65535
          %s322 = sxor.u32 %s319, %s321
          %v323 = vlaneseq
          %v324 = vshrl.u32 %v323, 7
          %s325 = smul.u32 %s29, 8
          %v326 = vstv %s325
          %v327 = vadd.s32 %v324, %v326
          %v328 = vlaneseq
          %v329 = vand.u32 %v328, 127
          %s330 = smul.u32 %s30, 64
          %v331 = vstv %s330
          %v332 = vadd.s32 %v329, %v331
          %v333 = vmul.u32 %v327, 128
          %v334 = vadd.s32 %v333, %v332
          %v335 = vmul.u32 %v334, 2
          %v336 = vshra.s32 %v335, 16
          %v337 = vand.u32 %v336, 65535
          %v338 = vxor.u32 %v335, %v337
          %v339 = vmul.u32 %v338, 2146121005
          %v340 = vshra.s32 %v339, 15
          %v341 = vand.u32 %v340, 131071
          %v342 = vxor.u32 %v339, %v341
          %v343 = vmul.u32 %v342, 2221713035
          %v344 = vshra.s32 %v343, 16
          %v345 = vand.u32 %v344, 65535
          %v346 = vxor.u32 %v343, %v345
          %v347 = vstv %s322
          %v348 = vxor.u32 %v346, %v347
          %v349 = vshra.s32 %v348, 16
          %v350 = vand.u32 %v349, 65535
          %v351 = vxor.u32 %v348, %v350
          %v352 = vmul.u32 %v351, 2146121005
          %v353 = vshra.s32 %v352, 15
          %v354 = vand.u32 %v353, 131071
          %v355 = vxor.u32 %v352, %v354
          %v356 = vmul.u32 %v355, 2221713035
          %v357 = vshra.s32 %v356, 16
          %v358 = vand.u32 %v357, 65535
          %v359 = vxor.u32 %v356, %v358
          %v360 = vadd.s32 %v335, 1
          %v361 = vshra.s32 %v360, 16
          %v362 = vand.u32 %v361, 65535
          %v363 = vxor.u32 %v360, %v362
          %v364 = vmul.u32 %v363, 2146121005
          %v365 = vshra.s32 %v364, 15
          %v366 = vand.u32 %v365, 131071
          %v367 = vxor.u32 %v364, %v366
          %v368 = vmul.u32 %v367, 2221713035
          %v369 = vshra.s32 %v368, 16
          %v370 = vand.u32 %v369, 65535
          %v371 = vxor.u32 %v368, %v370
          %v372 = vxor.u32 %v371, %v347
          %v373 = vshra.s32 %v372, 16
          %v374 = vand.u32 %v373, 65535
          %v375 = vxor.u32 %v372, %v374
          %v376 = vmul.u32 %v375, 2146121005
          %v377 = vshra.s32 %v376, 15
          %v378 = vand.u32 %v377, 131071
          %v379 = vxor.u32 %v376, %v378
          %v380 = vmul.u32 %v379, 2221713035
          %v381 = vshra.s32 %v380, 16
          %v382 = vand.u32 %v381, 65535
          %v383 = vxor.u32 %v380, %v382
          %v384 = vshra.s32 %v359, 9
          %v385 = vand.u32 %v384, 8388607
          %v386 = vor.u32 %v385, 1065353216
          %v388 = vsub.f32 %v386, 1.0
          %v389 = vsub.f32 1.0, %v388
          %v390 = vshra.s32 %v383, 9
          %v391 = vand.u32 %v390, 8388607
          %v392 = vor.u32 %v391, 1065353216
          %v394 = vsub.f32 %v392, 1.0
          %v395 = vlog2.pop %v389
          %v396 = vmul.f32 %v395, 0.6931472
          %v397 = vmul.f32 %v396, -2.0
          %v398 = vrsqrt.pop %v397
          %v399 = vmul.f32 %v397, %v398
          %vm400 = vcmp.eq.f32.partialorder %v397, inf
          %v401 = vsel %vm400, %v397, %v399
          %vm402 = vcmp.eq.f32.partialorder %v397, 0.0
          %v403 = vand.u32 %v397, 2147483648
          %v404 = vsel %vm402, %v403, %v401
          %v405 = vmul.f32 %v394, 6.2831855
          %v406 = vand.u32 2147483647, %v405
          %vm407 = vcmp.le.f32.partialorder %v406, 0.7853982
          %vm408 = vcmp.lt.s32.totalorder %v405, 0
          %v409 = vand.u32 %v405, 2139095040
          %v410 = vshrl.u32 %v409, 23
          %v411 = vsub.s32 %v410, 127
          %v412 = vand.u32 2147483647, %v405
          %v413 = vand.u32 %v412, 8388607
          %v414 = vor.u32 %v413, 8388608
          %v415 = vsub.s32 0, %v414
          %v416 = vadd.s32 %v411, 1
          %vm417 = vcmp.gt.s32.totalorder %v416, 0
          %v418 = vsel %vm417, %v416, 0
          %v419 = vshrl.u32 %v418, 5
          %v420 = vand.u32 %v418, 31
          %v421 = vsub.s32 32, %v420
          %v422 = vshrl.u32 683565275, %v421
          %v423 = vshll.u32 683565275, %v420
          %v424 = vshrl.u32 2475754826, %v421
          %v425 = vor.u32 %v423, %v424
          %v426 = vshll.u32 2475754826, %v420
          %v427 = vshrl.u32 2131351028, %v421
          %v428 = vor.u32 %v426, %v427
          %v429 = vshll.u32 2131351028, %v420
          %v430 = vshrl.u32 2102212464, %v421
          %v431 = vor.u32 %v429, %v430
          %v432 = vshll.u32 2102212464, %v420
          %v433 = vshrl.u32 920167782, %v421
          %v434 = vor.u32 %v432, %v433
          %v435 = vshll.u32 920167782, %v420
          %v436 = vshrl.u32 1326507024, %v421
          %v437 = vor.u32 %v435, %v436
          %vm438 = vcmp.lt.s32.totalorder %v419, 1
          %vm439 = vcmp.lt.s32.totalorder %v419, 2
          %vm440 = vcmp.lt.s32.totalorder %v419, 3
          %vm441 = vcmp.lt.s32.totalorder %v419, 4
          %v442 = vsel %vm438, %v422, %v425
          %v443 = vsel %vm441, %v431, 2102212464
          %v444 = vsel %vm440, %v428, %v443
          %v445 = vsel %vm439, %v442, %v444
          %v446 = vsel %vm438, %v425, %v428
          %v447 = vsel %vm441, %v434, 920167782
          %v448 = vsel %vm440, %v431, %v447
          %v449 = vsel %vm439, %v446, %v448
          %v450 = vsel %vm438, %v428, %v431
          %v451 = vsel %vm441, %v437, 1326507024
          %v452 = vsel %vm440, %v434, %v451
          %v453 = vsel %vm439, %v450, %v452
          %v454 = vshll.u32 %v414, 8
          %v455 = vmul.u32.u64.compose %v454, %v453
          %v456 = vextract.low.u32 %v455
          %v457 = vextract.high.u32 %v455
          %v458 = vmul.u32.u64.compose %v454, %v449
          %v459 = vextract.low.u32 %v458
          %v460 = vextract.high.u32 %v458
          %v461 = vmul.u32 %v454, %v445
          %v462 = vadd.s32 %v457, %v459
          %vm463 = vc.u32 %v457, %v459
          %v464 = vadd.s32 %v460, 1
          %v465 = vsel %vm463, %v464, %v460
          %v466 = vadd.s32 %v461, %v465
          %v467 = vadd.s32 %v466, 536870912
          %v468 = vshrl.u32 %v467, 30
          %v469 = vshll.u32 %v468, 30
          %v470 = vsub.s32 %v466, %v469
          %vm471 = vcmp.lt.s32.totalorder %v470, 0
          %v472 = vsub.s32 0, %v470
          %v473 = vsel %vm471, %v472, %v470
          %v474 = vclz %v473
          %v475 = vsub.s32 %v474, 2
          %vm476 = vcmp.gt.s32.totalorder 0, %v475
          %v477 = vsel %vm476, 0, %v475
          %v478 = vsub.s32 32, %v477
          %v479 = vshll.u32 %v470, %v477
          %v480 = vshrl.u32 %v462, %v478
          %v481 = vor.u32 %v479, %v480
          %v482 = vsub.s32 4294967266, %v477
          %v483 = vadd.s32 %v482, 127
          %v484 = vshll.u32 %v483, 23
          %v485 = vor.u32 4788187, %v484
          %v486 = vand.u32 2147483647, %v485
          %v488 = vcvt.s32.f32 %v481
          %v489 = vmul.f32 %v488, %v486
          %v490 = vxor.u32 %v489, 2147483648
          %v491 = vsel %vm408, %v490, %v489
          %v492 = vsub.s32 4, %v468
          %v493 = vsel %vm408, %v492, %v468
          %v494 = vsel %vm407, %v405, %v491
          %v495 = vsel %vm407, 0, %v493
          %v496 = vcosq.f32.pop %v494
          %v497 = vsinq.f32.pop %v494
          %vm498 = vweird.f32 %v405
          %v499 = vand.u32 %v495, 3
          %vm500 = vcmp.lt.s32.totalorder %v499, 2
          %vm501 = vcmp.eq.s32.totalorder %v499, 0
          %v502 = vxor.u32 %v497, 2147483648
          %v503 = vsel %vm501, %v496, %v502
          %vm504 = vcmp.eq.s32.totalorder %v499, 2
          %v505 = vxor.u32 %v496, 2147483648
          %v506 = vsel %vm504, %v505, %v497
          %v507 = vsel %vm500, %v503, %v506
          %v508 = vsel %vm498, nan, %v507
          %v509 = vmul.f32 %v404, %v508
          %v510 = vand.u32 2147483647, %v405
          %vm511 = vcmp.le.f32.partialorder %v510, 0.7853982
          %vm512 = vcmp.lt.s32.totalorder %v405, 0
          %v513 = vand.u32 %v405, 2139095040
          %v514 = vshrl.u32 %v513, 23
          %v515 = vsub.s32 %v514, 127
          %v516 = vand.u32 2147483647, %v405
          %v517 = vand.u32 %v516, 8388607
          %v518 = vor.u32 %v517, 8388608
          %v519 = vsub.s32 0, %v518
          %v520 = vadd.s32 %v515, 1
          %vm521 = vcmp.gt.s32.totalorder %v520, 0
          %v522 = vsel %vm521, %v520, 0
          %v523 = vshrl.u32 %v522, 5
          %v524 = vand.u32 %v522, 31
          %v525 = vsub.s32 32, %v524
          %v526 = vshrl.u32 683565275, %v525
          %v527 = vshll.u32 683565275, %v524
          %v528 = vshrl.u32 2475754826, %v525
          %v529 = vor.u32 %v527, %v528
          %v530 = vshll.u32 2475754826, %v524
          %v531 = vshrl.u32 2131351028, %v525
          %v532 = vor.u32 %v530, %v531
          %v533 = vshll.u32 2131351028, %v524
          %v534 = vshrl.u32 2102212464, %v525
          %v535 = vor.u32 %v533, %v534
          %v536 = vshll.u32 2102212464, %v524
          %v537 = vshrl.u32 920167782, %v525
          %v538 = vor.u32 %v536, %v537
          %v539 = vshll.u32 920167782, %v524
          %v540 = vshrl.u32 1326507024, %v525
          %v541 = vor.u32 %v539, %v540
          %vm542 = vcmp.lt.s32.totalorder %v523, 1
          %vm543 = vcmp.lt.s32.totalorder %v523, 2
          %vm544 = vcmp.lt.s32.totalorder %v523, 3
          %vm545 = vcmp.lt.s32.totalorder %v523, 4
          %v546 = vsel %vm542, %v526, %v529
          %v547 = vsel %vm545, %v535, 2102212464
          %v548 = vsel %vm544, %v532, %v547
          %v549 = vsel %vm543, %v546, %v548
          %v550 = vsel %vm542, %v529, %v532
          %v551 = vsel %vm545, %v538, 920167782
          %v552 = vsel %vm544, %v535, %v551
          %v553 = vsel %vm543, %v550, %v552
          %v554 = vsel %vm542, %v532, %v535
          %v555 = vsel %vm545, %v541, 1326507024
          %v556 = vsel %vm544, %v538, %v555
          %v557 = vsel %vm543, %v554, %v556
          %v558 = vshll.u32 %v518, 8
          %v559 = vmul.u32.u64.compose %v558, %v557
          %v560 = vextract.low.u32 %v559
          %v561 = vextract.high.u32 %v559
          %v562 = vmul.u32.u64.compose %v558, %v553
          %v563 = vextract.low.u32 %v562
          %v564 = vextract.high.u32 %v562
          %v565 = vmul.u32 %v558, %v549
          %v566 = vadd.s32 %v561, %v563
          %vm567 = vc.u32 %v561, %v563
          %v568 = vadd.s32 %v564, 1
          %v569 = vsel %vm567, %v568, %v564
          %v570 = vadd.s32 %v565, %v569
          %v571 = vadd.s32 %v570, 536870912
          %v572 = vshrl.u32 %v571, 30
          %v573 = vshll.u32 %v572, 30
          %v574 = vsub.s32 %v570, %v573
          %vm575 = vcmp.lt.s32.totalorder %v574, 0
          %v576 = vsub.s32 0, %v574
          %v577 = vsel %vm575, %v576, %v574
          %v578 = vclz %v577
          %v579 = vsub.s32 %v578, 2
          %vm580 = vcmp.gt.s32.totalorder 0, %v579
          %v581 = vsel %vm580, 0, %v579
          %v582 = vsub.s32 32, %v581
          %v583 = vshll.u32 %v574, %v581
          %v584 = vshrl.u32 %v566, %v582
          %v585 = vor.u32 %v583, %v584
          %v586 = vsub.s32 4294967266, %v581
          %v587 = vadd.s32 %v586, 127
          %v588 = vshll.u32 %v587, 23
          %v589 = vor.u32 4788187, %v588
          %v590 = vand.u32 2147483647, %v589
          %v592 = vcvt.s32.f32 %v585
          %v593 = vmul.f32 %v592, %v590
          %v594 = vxor.u32 %v593, 2147483648
          %v595 = vsel %vm512, %v594, %v593
          %v596 = vsub.s32 4, %v572
          %v597 = vsel %vm512, %v596, %v572
          %v598 = vsel %vm511, %v405, %v595
          %v599 = vsel %vm511, 0, %v597
          %v600 = vcosq.f32.pop %v598
          %v601 = vsinq.f32.pop %v598
          %vm602 = vweird.f32 %v405
          %v603 = vadd.s32 %v599, 3
          %v604 = vand.u32 %v603, 3
          %vm605 = vcmp.lt.s32.totalorder %v604, 2
          %vm606 = vcmp.eq.s32.totalorder %v604, 0
          %v607 = vxor.u32 %v601, 2147483648
          %v608 = vsel %vm606, %v600, %v607
          %vm609 = vcmp.eq.s32.totalorder %v604, 2
          %v610 = vxor.u32 %v600, 2147483648
          %v611 = vsel %vm609, %v610, %v601
          %v612 = vsel %vm605, %v608, %v611
          %v613 = vsel %vm602, nan, %v612
          %v614 = vmul.f32 %v404, %v613
          %616 = vrot.lane.b32.xlu0 %v614, 64
          %v617 = vpop.permute.xlu0 %616
          %vm619 = vcmask 523264
          %v620 = vsel %vm619, %v509, %v617
          %v621 = vld [vmem:[#allocation2] sm:$0xff]
          %v622 = vmul.f32 %v620, 0.1
          %v623 = vadd.f32 %v621, %v622
          %624 = vst [vmem:[%s229] sm:$0xff] %v623
        $region44: #{tpu_custom_call.1} parent=27 // pred_fallthru
          _
        %s625 = sand.u32 %s109, 1
        %s626 = scalar_lea.sflag [#allocation7], %s625
        %s627 = sand.u32 %s109, 1
        %s628 = smul.addr %s627, 8
        %s629 = scalar_lea.vmem [#allocation10], %s628
        // Predicated region
        $region45: #{tpu_custom_call.1} parent=27 // pred_check
          %p630 = pneg %p119
        $region46: #{tpu_custom_call.1} parent=27 // pred_check_branch
          %632 = sbr.rel (%p630) target = $region48
        $region47: #{tpu_custom_call.1} parent=27 // pred_region
          %s634 = ssub.s32 128, 128
          %635 = vsyncadd %s626, %s634
          %s636 = smul.addr %s29, 2
          %s637 = sadd.s32 %s30, %s636
          %s638 = smul.addr %s637, 128
          %s639 = scalar_lea.hbm %s3, %s638
          %s641 = sshll.u32 %s629, 4
          %s642 = int_to_ptr.vmem [resolvable:$true] %s641
          %644 = dma.vmem_to_hbm [thread:$0]  %s642, 128, %s639, %s626
        $region48: #{tpu_custom_call.1} parent=27 // pred_fallthru
          _
      $region28: #{tpu_custom_call.1} parent=5 // pred_fallthru
        _
      %p645 = scmp.le.s32.totalorder 2, %s19
      // Predicated region
      $region49: #{tpu_custom_call.1} parent=5 // pred_check
        %p646 = pneg %p645
      $region50: #{tpu_custom_call.1} parent=5 // pred_check_branch
        %648 = sbr.rel (%p646) target = $region52
      $region51: #{tpu_custom_call.1} parent=5 // pred_region
        %s649 = ssub.s32 %s19, 2
        // Predicated region
        $region53: #{tpu_custom_call.1} parent=51 // pred_check
          %p650 = pneg %p125
        $region54: #{tpu_custom_call.1} parent=51 // pred_check_branch
          %652 = sbr.rel (%p650) target = $region56
        $region55: #{tpu_custom_call.1} parent=51 // pred_region
          %s653 = sand.u32 %s110, 1
          %s654 = scalar_lea.sflag [#allocation7], %s653
          %s655 = sand.u32 %s110, 1
          %s656 = smul.addr %s655, 8
          %s657 = scalar_lea.vmem [#allocation10], %s656
          %658 = dma.done %s654, 128
        $region56: #{tpu_custom_call.1} parent=51 // pred_fallthru
          _
      $region52: #{tpu_custom_call.1} parent=5 // pred_fallthru
        _
    $region6: #{tpu_custom_call.1} parent=1 // loop_footer
      %s23 = sadd.s32 1, %s19
    $region7: #{tpu_custom_call.1} parent=1 // loop_footer_branch
      %18 = sbr.rel target = $region3
    $region8: #{tpu_custom_call.1} parent=1 // loop_exit
      _
    %659 = vsyncpa [#allocation6], 1
    %s660 = scalar_lea.sflag [#allocation6], 1
    %661 = vsyncpa %s660, 1
    %662 = vsyncpa [#allocation9], 1
    %s663 = scalar_lea.sflag [#allocation9], 1
    %664 = vsyncpa %s663, 1
    %665 = vsyncpa [#allocation7], 1
    %s666 = scalar_lea.sflag [#allocation7], 1
    %667 = vsyncpa %s666, 1

</llo_original>
